<compile_context>
chip_gen: v7x
topology: tpu7x:2x2x1
jax: 0.10.0
libtpu: 0.0.40
codegen_flags: <defaults>
</compile_context>

<pallas_src>
import functools

import jax
import jax.numpy as jnp
from jax.experimental import pallas as pl
from jax.experimental.pallas import tpu as pltpu

DIM_X = 2
DIM_Z = 4
DIN = DIM_X + DIM_Z
HIDDEN = 32
NUM_HEADS = 4
FUSED_H = NUM_HEADS * HIDDEN  # 128


def _softplus(v):
    # Matches torch.nn.Softplus(beta=1, threshold=20)
    return jnp.where(v > 20.0, v, jnp.log1p(jnp.exp(jnp.minimum(v, 20.0))))


def greybox_kernel(xT_ref, zT_ref, w1x_ref, w1z_ref, b1_ref,
                   w2_ref, b2_ref, ax_ref, az_ref, out_ref):
    """One batch tile (feature-major: batch on lanes).

    xT_ref : VMEM (2, TB)    rows: v_IN, i_OUT
    zT_ref : VMEM (4, TB)    rows: v_OUT, i_IN, v_INT, i_INT
    w1x_ref: VMEM (4H, 2)    fused first-layer weights (x columns)
    w1z_ref: VMEM (4H, 4)    fused first-layer weights (z columns)
    b1_ref : VMEM (4H, 1)
    w2_ref : VMEM (4, 4H)    block-diagonal second layer (head-permuted)
    b2_ref : VMEM (4, 1)
    ax_ref : VMEM (4, 2)     numerator coefficients on x (R1/R2 baked in)
    az_ref : VMEM (4, 4)     numerator coefficients on z (R1/R2 baked in)
    out_ref: VMEM (4, TB)    rows: d_v_OUT, d_i_IN, d_v_INT, d_i_INT
    """
    xT = xT_ref[...]  # [2, TB]
    zT = zT_ref[...]  # [4, TB]

    # All four heads in one fused first layer + one tanh over 128 hidden rows
    # (full vreg/EUP utilization).
    h = jnp.tanh(
        jnp.dot(w1x_ref[...], xT, preferred_element_type=jnp.float32)
        + jnp.dot(w1z_ref[...], zT, preferred_element_type=jnp.float32)
        + b1_ref[...]
    )  # [4H, TB]

    # Block-diagonal second layer -> the four head outputs as rows
    # (host-permuted to output-row order: C2, L1, C1, L2).
    y = jnp.dot(w2_ref[...], h, preferred_element_type=jnp.float32) + b2_ref[...]
    effs = _softplus(y)  # [4, TB]

    # Reciprocals via EUP (approx) + one Newton step to recover ~f32 accuracy.
    inv = pl.reciprocal(effs, approx=True)
    inv = inv * (2.0 - effs * inv)

    # Numerators for all four output rows in one shot (R1/R2 already folded
    # into the coefficient matrices host-side).
    num = (jnp.dot(ax_ref[...], xT, preferred_element_type=jnp.float32)
           + jnp.dot(az_ref[...], zT, preferred_element_type=jnp.float32))  # [4, TB]

    # Single full, lane-dense output store.
    out_ref[...] = num * inv


def pack_params(params):
    """Host-side (one-time) repack of module parameters for the fused kernel.

    Heads are permuted to output-row order [C2, L1, C1, L2] so eff row p pairs
    directly with output row p. softplus(R1), softplus(R2) are applied here and
    folded into the numerator coefficient matrices (hoisted out of the kernel).
    """
    perm = jnp.array([1, 2, 0, 3])            # original head order is [C1, C2, L1, L2]
    w1 = params["w1"][perm]                   # (4, DIN, H)
    b1 = params["b1"][perm]                   # (4, H)
    w2 = params["w2"][perm][:, :, 0]          # (4, H)
    b2 = params["b2"][0][perm]                # (4,)
    h = w1.shape[-1]

    w1t = jnp.transpose(w1, (0, 2, 1)).reshape(NUM_HEADS * h, DIN)  # (4H, DIN)
    w1t_x = w1t[:, :DIM_X]                                          # (4H, 2)
    w1t_z = w1t[:, DIM_X:]                                          # (4H, 4)
    b1c = b1.reshape(NUM_HEADS * h, 1)                              # (4H, 1)
    # Block-diagonal second layer: output row p only reads hidden block p.
    w2t = (jnp.eye(NUM_HEADS, dtype=w2.dtype)[:, :, None]
           * w2[None, :, :]).reshape(NUM_HEADS, NUM_HEADS * h)      # (4, 4H)
    b2c = b2.reshape(NUM_HEADS, 1)                                  # (4, 1)

    r_sp = jax.nn.softplus(params["r"].astype(jnp.float32))
    R1 = r_sp[0]
    R2 = r_sp[1]
    # Numerator coefficients (output-row order):
    #   row0 d_v_OUT: i_INT - i_OUT
    #   row1 d_i_IN : v_IN - R1*i_IN - v_INT
    #   row2 d_v_INT: i_IN - i_INT
    #   row3 d_i_INT: v_INT - R2*i_INT - v_OUT
    # x rows: [v_IN, i_OUT]; z rows: [v_OUT, i_IN, v_INT, i_INT]
    zero = jnp.float32(0.0)
    one = jnp.float32(1.0)
    ax = jnp.array([[zero, -one],
                    [one, zero],
                    [zero, zero],
                    [zero, zero]], dtype=jnp.float32)               # (4, 2)
    az = jnp.stack([
        jnp.array([0.0, 0.0, 0.0, 1.0], dtype=jnp.float32),
        jnp.stack([zero, -R1, -one, zero]),
        jnp.array([0.0, 1.0, 0.0, -1.0], dtype=jnp.float32),
        jnp.stack([-one, zero, one, -R2]),
    ])                                                              # (4, 4)

    f32 = lambda a: a.astype(jnp.float32)
    return {"w1t_x": f32(w1t_x), "w1t_z": f32(w1t_z), "b1c": f32(b1c),
            "w2t": f32(w2t), "b2c": f32(b2c), "ax": ax, "az": az}


@functools.partial(jax.jit, static_argnames=("tile_b",))
def greybox_forward(z, x, packed, tile_b=2048):
    """Pallas-backed forward of GreyboxODE1_4th_order. z:[B,4], x:[B,2] -> [B,4]."""
    B = z.shape[0]
    # Lane-aligned batch tile; keep >=2 grid steps when B allows (megacore).
    tb = int(min(tile_b, max(128, ((B + 255) // 256) * 128)))
    n_tiles = -(-B // tb)
    B_pad = n_tiles * tb

    # Feature-major (lane-dense) inputs: batch on lanes.
    xT = jnp.transpose(x.astype(jnp.float32))  # (2, B)
    zT = jnp.transpose(z.astype(jnp.float32))  # (4, B)
    if B_pad != B:
        xT = jnp.pad(xT, ((0, 0), (0, B_pad - B)))
        zT = jnp.pad(zT, ((0, 0), (0, B_pad - B)))

    outT = pl.pallas_call(
        greybox_kernel,
        out_shape=jax.ShapeDtypeStruct((NUM_HEADS, B_pad), jnp.float32),
        grid_spec=pltpu.PrefetchScalarGridSpec(
            num_scalar_prefetch=0,
            grid=(n_tiles,),
            in_specs=[
                pl.BlockSpec((DIM_X, tb), lambda i: (0, i)),            # x^T
                pl.BlockSpec((DIM_Z, tb), lambda i: (0, i)),            # z^T
                pl.BlockSpec((FUSED_H, DIM_X), lambda i: (0, 0)),       # fused W1^T (x cols)
                pl.BlockSpec((FUSED_H, DIM_Z), lambda i: (0, 0)),       # fused W1^T (z cols)
                pl.BlockSpec((FUSED_H, 1), lambda i: (0, 0)),           # fused b1
                pl.BlockSpec((NUM_HEADS, FUSED_H), lambda i: (0, 0)),   # block-diag W2^T
                pl.BlockSpec((NUM_HEADS, 1), lambda i: (0, 0)),         # b2
                pl.BlockSpec((NUM_HEADS, DIM_X), lambda i: (0, 0)),     # numerator coeffs (x)
                pl.BlockSpec((NUM_HEADS, DIM_Z), lambda i: (0, 0)),     # numerator coeffs (z)
            ],
            out_specs=pl.BlockSpec((NUM_HEADS, tb), lambda i: (0, i)),
        ),
        compiler_params=pltpu.CompilerParams(
            dimension_semantics=("parallel",)),
    )(xT, zT, packed["w1t_x"], packed["w1t_z"], packed["b1c"],
      packed["w2t"], packed["b2c"], packed["ax"], packed["az"])

    return jnp.transpose(outT[:, :B])  # (B, 4)


def init_params(key, dim_x=DIM_X, dim_z=DIM_Z, hidden=HIDDEN,
                R1=50 * 0.001, R2=10 * 1e-06):
    """Deterministic synthetic parameters mirroring the module's __init__ shapes."""
    din = dim_x + dim_z
    keys = jax.random.split(key, 8)
    bound1 = 1.0 / jnp.sqrt(din)
    bound2 = 1.0 / jnp.sqrt(hidden)
    w1 = jax.random.uniform(keys[0], (4, din, hidden), jnp.float32, -bound1, bound1)
    b1 = jax.random.uniform(keys[1], (4, hidden), jnp.float32, -bound1, bound1)
    w2 = jax.random.uniform(keys[2], (4, hidden, 1), jnp.float32, -bound2, bound2)
    b2 = jax.random.uniform(keys[3], (1, 4), jnp.float32, -bound2, bound2)
    # inverse_softplus(y) = log(exp(y) - 1)
    r = jnp.log(jnp.expm1(jnp.array([R1, R2], dtype=jnp.float32)))
    return {"w1": w1, "b1": b1, "w2": w2, "b2": b2, "r": r}


def reference_forward(z, x, params):
    """Pure-JAX reference of the PyTorch forward (for correctness check)."""
    xz = jnp.concatenate([x, z], axis=-1).astype(jnp.float32)
    effs = []
    for k in range(4):  # 0:C1, 1:C2, 2:L1, 3:L2
        h = jnp.tanh(xz @ params["w1"][k] + params["b1"][k])
        y = h @ params["w2"][k] + params["b2"][0, k]
        effs.append(jax.nn.softplus(y)[:, 0])
    C1_eff, C2_eff, L1_eff, L2_eff = effs
    R1 = jax.nn.softplus(params["r"][0])
    R2 = jax.nn.softplus(params["r"][1])
    v_IN, i_OUT = x[:, 0], x[:, 1]
    v_OUT, i_IN, v_INT, i_INT = z[:, 0], z[:, 1], z[:, 2], z[:, 3]
    d_v_INT_dt = (i_IN - i_INT) / C1_eff
    d_i_IN_dt = v_IN / L1_eff - R1 * i_IN / L1_eff - v_INT / L1_eff
    d_v_OUT_dt = i_INT / C2_eff - i_OUT / C2_eff
    d_i_INT_dt = v_INT / L2_eff - R2 * i_INT / L2_eff - v_OUT / L2_eff
    return jnp.stack([d_v_OUT_dt, d_i_IN_dt, d_v_INT_dt, d_i_INT_dt], axis=-1)


if __name__ == "__main__":
    key = jax.random.PRNGKey(0)
    kp, kx, kz = jax.random.split(key, 3)

    B = 300  # not a multiple of the tile -> exercises padding + 2 grid steps
    params = init_params(kp)
    packed = pack_params(params)           # one-time host-side repack
    x = jax.random.normal(kx, (B, DIM_X), dtype=jnp.float32)   # drive signals
    z = jax.random.normal(kz, (B, DIM_Z), dtype=jnp.float32)   # ODE state

    out = greybox_forward(z, x, packed)
    out = jax.block_until_ready(out)

    ref = reference_forward(z, x, params)
    assert out.shape == (B, 4)
    assert jnp.allclose(out, ref, atol=1e-4, rtol=1e-3), (
        float(jnp.max(jnp.abs(out - ref))))

    # TODO(synk): t-based linear interpolation (get_current_x) is host-side
    # indexing glue in the original module and is not part of this kernel.
    print("KERNEL_OK")
</pallas_src>

<mosaic_0001>
module attributes {stable_mosaic.version = 11 : i64} {
  func.func @greybox_kernel(%arg0: i32, %arg1: memref<2x256xf32, #tpu.memory_space<vmem>>, %arg2: memref<4x256xf32, #tpu.memory_space<vmem>>, %arg3: memref<128x2xf32, #tpu.memory_space<vmem>>, %arg4: memref<128x4xf32, #tpu.memory_space<vmem>>, %arg5: memref<128x1xf32, #tpu.memory_space<vmem>>, %arg6: memref<4x128xf32, #tpu.memory_space<vmem>>, %arg7: memref<4x1xf32, #tpu.memory_space<vmem>>, %arg8: memref<4x2xf32, #tpu.memory_space<vmem>>, %arg9: memref<4x4xf32, #tpu.memory_space<vmem>>, %arg10: memref<4x256xf32, #tpu.memory_space<vmem>>) attributes {dimension_semantics = [#tpu.dimension_semantics<parallel>], iteration_bounds = array<i64: 2>, scalar_prefetch = 0 : i64, scratch_operands = 0 : i64, tpu.core_type = #tpu.core_type<tc>, window_params = [{transform_indices = @transform_0, window_bounds = array<i64: 2, 256>}, {transform_indices = @transform_1, window_bounds = array<i64: 4, 256>}, {pipeline_mode = #tpu.pipeline_mode<synchronous>, transform_indices = @transform_2, window_bounds = array<i64: 128, 2>}, {pipeline_mode = #tpu.pipeline_mode<synchronous>, transform_indices = @transform_3, window_bounds = array<i64: 128, 4>}, {pipeline_mode = #tpu.pipeline_mode<synchronous>, transform_indices = @transform_4, window_bounds = array<i64: 128, 1>}, {pipeline_mode = #tpu.pipeline_mode<synchronous>, transform_indices = @transform_5, window_bounds = array<i64: 4, 128>}, {pipeline_mode = #tpu.pipeline_mode<synchronous>, transform_indices = @transform_6, window_bounds = array<i64: 4, 1>}, {pipeline_mode = #tpu.pipeline_mode<synchronous>, transform_indices = @transform_7, window_bounds = array<i64: 4, 2>}, {pipeline_mode = #tpu.pipeline_mode<synchronous>, transform_indices = @transform_8, window_bounds = array<i64: 4, 4>}, {transform_indices = @transform_9, window_bounds = array<i64: 4, 256>}]} {
    %c0 = arith.constant 0 : index
    %c0_0 = arith.constant 0 : index
    %0 = vector.load %arg1[%c0, %c0_0] : memref<2x256xf32, #tpu.memory_space<vmem>>, vector<2x256xf32>
    %c0_1 = arith.constant 0 : index
    %c0_2 = arith.constant 0 : index
    %1 = vector.load %arg2[%c0_1, %c0_2] : memref<4x256xf32, #tpu.memory_space<vmem>>, vector<4x256xf32>
    %c0_3 = arith.constant 0 : index
    %c0_4 = arith.constant 0 : index
    %2 = vector.load %arg3[%c0_3, %c0_4] : memref<128x2xf32, #tpu.memory_space<vmem>>, vector<128x2xf32>
    %cst = arith.constant dense<0.000000e+00> : vector<128x256xf32>
    %3 = tpu.matmul %2, %0, %cst {dimension_numbers = #tpu.dot_dimension_numbers<[1], [0], [0], [1], [0, 0, 1, 1], [], []>} : vector<128x2xf32>, vector<2x256xf32>, vector<128x256xf32> -> vector<128x256xf32>
    %c0_5 = arith.constant 0 : index
    %c0_6 = arith.constant 0 : index
    %4 = vector.load %arg4[%c0_5, %c0_6] : memref<128x4xf32, #tpu.memory_space<vmem>>, vector<128x4xf32>
    %cst_7 = arith.constant dense<0.000000e+00> : vector<128x256xf32>
    %5 = tpu.matmul %4, %1, %cst_7 {dimension_numbers = #tpu.dot_dimension_numbers<[1], [0], [0], [1], [0, 0, 1, 1], [], []>} : vector<128x4xf32>, vector<4x256xf32>, vector<128x256xf32> -> vector<128x256xf32>
    %6 = arith.addf %3, %5 : vector<128x256xf32>
    %c0_8 = arith.constant 0 : index
    %c0_9 = arith.constant 0 : index
    %7 = vector.load %arg5[%c0_8, %c0_9] : memref<128x1xf32, #tpu.memory_space<vmem>>, vector<128x1xf32>
    %8 = vector.broadcast %7 : vector<128x1xf32> to vector<128x256xf32>
    %9 = arith.addf %6, %8 : vector<128x256xf32>
    %10 = math.tanh %9 : vector<128x256xf32>
    %c0_10 = arith.constant 0 : index
    %c0_11 = arith.constant 0 : index
    %11 = vector.load %arg6[%c0_10, %c0_11] : memref<4x128xf32, #tpu.memory_space<vmem>>, vector<4x128xf32>
    %cst_12 = arith.constant dense<0.000000e+00> : vector<4x256xf32>
    %12 = tpu.matmul %11, %10, %cst_12 {dimension_numbers = #tpu.dot_dimension_numbers<[1], [0], [0], [1], [0, 0, 1, 1], [], []>} : vector<4x128xf32>, vector<128x256xf32>, vector<4x256xf32> -> vector<4x256xf32>
    %c0_13 = arith.constant 0 : index
    %c0_14 = arith.constant 0 : index
    %13 = vector.load %arg7[%c0_13, %c0_14] : memref<4x1xf32, #tpu.memory_space<vmem>>, vector<4x1xf32>
    %14 = vector.broadcast %13 : vector<4x1xf32> to vector<4x256xf32>
    %15 = arith.addf %12, %14 : vector<4x256xf32>
    %cst_15 = arith.constant 2.000000e+01 : f32
    %16 = vector.broadcast %cst_15 : f32 to vector<4x256xf32>
    %17 = arith.cmpf ogt, %15, %16 : vector<4x256xf32>
    %cst_16 = arith.constant 2.000000e+01 : f32
    %18 = vector.broadcast %cst_16 : f32 to vector<4x256xf32>
    %19 = arith.minimumf %15, %18 : vector<4x256xf32>
    %20 = math.exp %19 : vector<4x256xf32>
    %21 = math.log1p %20 : vector<4x256xf32>
    %22 = arith.select %17, %15, %21 : vector<4x256xi1>, vector<4x256xf32>
    %23 = tpu.reciprocal %22 {approx = true} : vector<4x256xf32> -> vector<4x256xf32>
    %24 = arith.mulf %22, %23 : vector<4x256xf32>
    %cst_17 = arith.constant 2.000000e+00 : f32
    %25 = vector.broadcast %cst_17 : f32 to vector<4x256xf32>
    %26 = arith.subf %25, %24 : vector<4x256xf32>
    %27 = arith.mulf %23, %26 : vector<4x256xf32>
    %c0_18 = arith.constant 0 : index
    %c0_19 = arith.constant 0 : index
    %28 = vector.load %arg8[%c0_18, %c0_19] : memref<4x2xf32, #tpu.memory_space<vmem>>, vector<4x2xf32>
    %cst_20 = arith.constant dense<0.000000e+00> : vector<4x256xf32>
    %29 = tpu.matmul %28, %0, %cst_20 {dimension_numbers = #tpu.dot_dimension_numbers<[1], [0], [0], [1], [0, 0, 1, 1], [], []>} : vector<4x2xf32>, vector<2x256xf32>, vector<4x256xf32> -> vector<4x256xf32>
    %c0_21 = arith.constant 0 : index
    %c0_22 = arith.constant 0 : index
    %30 = vector.load %arg9[%c0_21, %c0_22] : memref<4x4xf32, #tpu.memory_space<vmem>>, vector<4x4xf32>
    %cst_23 = arith.constant dense<0.000000e+00> : vector<4x256xf32>
    %31 = tpu.matmul %30, %1, %cst_23 {dimension_numbers = #tpu.dot_dimension_numbers<[1], [0], [0], [1], [0, 0, 1, 1], [], []>} : vector<4x4xf32>, vector<4x256xf32>, vector<4x256xf32> -> vector<4x256xf32>
    %32 = arith.addf %29, %31 : vector<4x256xf32>
    %33 = arith.mulf %32, %27 : vector<4x256xf32>
    %c0_24 = arith.constant 0 : index
    %c0_25 = arith.constant 0 : index
    %34 = vector.load %arg10[%c0_24, %c0_25] : memref<4x256xf32, #tpu.memory_space<vmem>>, vector<4x256xf32>
    tpu.vector_store %arg10[%c0_24, %c0_25], %33 {strides = array<i32>} : memref<4x256xf32, #tpu.memory_space<vmem>>, vector<4x256xf32>,
    return
  }
  func.func @transform_0(%arg0: i32) -> (i32, i32) {
    %c0_i32 = arith.constant 0 : i32
    %c0_i32_0 = arith.constant 0 : i32
    return %c0_i32, %arg0 : i32, i32
  }
  func.func @transform_1(%arg0: i32) -> (i32, i32) {
    %c0_i32 = arith.constant 0 : i32
    %c0_i32_0 = arith.constant 0 : i32
    return %c0_i32, %arg0 : i32, i32
  }
  func.func @transform_2(%arg0: i32) -> (i32, i32) {
    %c0_i32 = arith.constant 0 : i32
    %c0_i32_0 = arith.constant 0 : i32
    %c0_i32_1 = arith.constant 0 : i32
    return %c0_i32, %c0_i32_0 : i32, i32
  }
  func.func @transform_3(%arg0: i32) -> (i32, i32) {
    %c0_i32 = arith.constant 0 : i32
    %c0_i32_0 = arith.constant 0 : i32
    %c0_i32_1 = arith.constant 0 : i32
    return %c0_i32, %c0_i32_0 : i32, i32
  }
  func.func @transform_4(%arg0: i32) -> (i32, i32) {
    %c0_i32 = arith.constant 0 : i32
    %c0_i32_0 = arith.constant 0 : i32
    %c0_i32_1 = arith.constant 0 : i32
    return %c0_i32, %c0_i32_0 : i32, i32
  }
  func.func @transform_5(%arg0: i32) -> (i32, i32) {
    %c0_i32 = arith.constant 0 : i32
    %c0_i32_0 = arith.constant 0 : i32
    %c0_i32_1 = arith.constant 0 : i32
    return %c0_i32, %c0_i32_0 : i32, i32
  }
  func.func @transform_6(%arg0: i32) -> (i32, i32) {
    %c0_i32 = arith.constant 0 : i32
    %c0_i32_0 = arith.constant 0 : i32
    %c0_i32_1 = arith.constant 0 : i32
    return %c0_i32, %c0_i32_0 : i32, i32
  }
  func.func @transform_7(%arg0: i32) -> (i32, i32) {
    %c0_i32 = arith.constant 0 : i32
    %c0_i32_0 = arith.constant 0 : i32
    %c0_i32_1 = arith.constant 0 : i32
    return %c0_i32, %c0_i32_0 : i32, i32
  }
  func.func @transform_8(%arg0: i32) -> (i32, i32) {
    %c0_i32 = arith.constant 0 : i32
    %c0_i32_0 = arith.constant 0 : i32
    %c0_i32_1 = arith.constant 0 : i32
    return %c0_i32, %c0_i32_0 : i32, i32
  }
  func.func @transform_9(%arg0: i32) -> (i32, i32) {
    %c0_i32 = arith.constant 0 : i32
    %c0_i32_0 = arith.constant 0 : i32
    return %c0_i32, %arg0 : i32, i32
  }
}

</mosaic_0001>

<llo_original>
// kernel: greybox_forward.1
$region0: #{greybox_forward.1}
  #allocation0 [shape = 'u32[]', space=smem, size = 0x4, offset = 0x4, fixed_abs, tag = 'smem constant byte address 0x4 - core index']
  #allocation1 [shape = 'u32[144,128]{1,0:T(1,128)}', space=vmem, size = 0x12000, scoped, tag = 'internal scratch']
  %s0 = inlined_call_operand.vmem [shape: f32[2,512], index: 0, kind: input, shape index: {}]
  %s1 = inlined_call_operand.vmem [shape: f32[4,512], index: 1, kind: input, shape index: {}]
  %s2 = inlined_call_operand.vmem [shape: f32[128,2], index: 2, kind: input, shape index: {}]
  %s3 = inlined_call_operand.vmem [shape: f32[128,4], index: 3, kind: input, shape index: {}]
  %s4 = inlined_call_operand.vmem [shape: f32[128,1], index: 4, kind: input, shape index: {}]
  %s5 = inlined_call_operand.vmem [shape: f32[4,128], index: 5, kind: input, shape index: {}]
  %s6 = inlined_call_operand.vmem [shape: f32[4,1], index: 6, kind: input, shape index: {}]
  %s7 = inlined_call_operand.vmem [shape: f32[4,2], index: 7, kind: input, shape index: {}]
  %s8 = inlined_call_operand.vmem [shape: f32[4,4], index: 8, kind: input, shape index: {}]
  %s9 = inlined_call_operand.vmem [shape: f32[4,512], index: 9, kind: output, shape index: {}]
  %s10 = sld [smem:[#allocation0]]
  $region69: #{greybox_forward.1} parent=0
    _
  %s12 = ssub.s32 1, %s10
  %s13 = scalar_select 0, %s12, %s10
  loop: start=0, step=1, limit=4
  $region2: #{greybox_forward.1} parent=0 // loop_pre_header
    _
  $region3: #{greybox_forward.1} parent=0 // loop_header
    %s15 = sphi 0, %s19
    %p16 = scmp.ge.s32.totalorder %s15, 4
    %s25 = sphi 0, %s27
    %s28 = sphi 0, %s25
    %s29 = sphi 0, %s28
    %s45 = sphi 0, %s29
    %s51 = sphi 0, %s53
    %s54 = sphi 0, %s51
    %s55 = sphi 0, %s54
    %s71 = sphi 0, %s55
    %s75 = sphi 0, %s75
    %s77 = sphi 0, %s75
    %s78 = sphi 0, %s77
    %s92 = sphi 0, %s78
    %s96 = sphi 0, %s96
    %s98 = sphi 0, %s96
    %s99 = sphi 0, %s98
    %s113 = sphi 0, %s99
    %s117 = sphi 0, %s117
    %s119 = sphi 0, %s117
    %s120 = sphi 0, %s119
    %s134 = sphi 0, %s120
    %s138 = sphi 0, %s138
    %s140 = sphi 0, %s138
    %s141 = sphi 0, %s140
    %s155 = sphi 0, %s141
    %s159 = sphi 0, %s159
    %s161 = sphi 0, %s159
    %s162 = sphi 0, %s161
    %s176 = sphi 0, %s162
    %s180 = sphi 0, %s180
    %s182 = sphi 0, %s180
    %s183 = sphi 0, %s182
    %s197 = sphi 0, %s183
    %s201 = sphi 0, %s201
    %s203 = sphi 0, %s201
    %s204 = sphi 0, %s203
    %s218 = sphi 0, %s204
    %s224 = sphi 0, %s226
    %s227 = sphi 0, %s224
    %s228 = sphi 0, %s227
    %s244 = sphi 0, %s228
  $region4: #{greybox_forward.1} parent=0 // loop_header_branch
    %18 = sbr.rel (%p16) target = $region8
  $region5: #{greybox_forward.1} parent=0 // loop_body
    %s20 = ssub.s32 %s15, 1
    %s21 = ssub.s32 %s15, 2
    %s22 = sadd.s32 %s15, 1
    %s23 = ssub.s32 %s15, %s22
    %p24 = scmp.eq.s32.totalorder %s23, 0
    %s26 = sadd.s32 %s25, 1
    %s27 = scalar_select %p24, %s25, %s26
    %p30 = pneg %p24
    %p31 = scmp.eq.s32.totalorder %s15, 1
    %p32 = por %p30, %p31
    %p33 = scmp.ne.s32.totalorder %s25, %s28
    %p34 = scmp.eq.s32.totalorder %s15, 0
    %p35 = por %p33, %p34
    %p36 = scmp.ne.s32.totalorder %s25, %s28
    %p37 = scmp.eq.s32.totalorder %s20, 1
    %p38 = por %p36, %p37
    %p39 = scmp.ne.s32.totalorder %s28, %s29
    %p40 = scmp.eq.s32.totalorder %s20, 0
    %p41 = por %p39, %p40
    %p42 = scmp.ne.s32.totalorder %s28, %s29
    %p43 = scmp.eq.s32.totalorder %s21, 1
    %p44 = por %p42, %p43
    %p46 = scmp.ne.s32.totalorder %s29, %s45
    %p47 = scmp.eq.s32.totalorder %s21, 0
    %p48 = por %p46, %p47
    %s49 = ssub.s32 %s15, %s22
    %p50 = scmp.eq.s32.totalorder %s49, 0
    %s52 = sadd.s32 %s51, 1
    %s53 = scalar_select %p50, %s51, %s52
    %p56 = pneg %p50
    %p57 = scmp.eq.s32.totalorder %s15, 1
    %p58 = por %p56, %p57
    %p59 = scmp.ne.s32.totalorder %s51, %s54
    %p60 = scmp.eq.s32.totalorder %s15, 0
    %p61 = por %p59, %p60
    %p62 = scmp.ne.s32.totalorder %s51, %s54
    %p63 = scmp.eq.s32.totalorder %s20, 1
    %p64 = por %p62, %p63
    %p65 = scmp.ne.s32.totalorder %s54, %s55
    %p66 = scmp.eq.s32.totalorder %s20, 0
    %p67 = por %p65, %p66
    %p68 = scmp.ne.s32.totalorder %s54, %s55
    %p69 = scmp.eq.s32.totalorder %s21, 1
    %p70 = por %p68, %p69
    %p72 = scmp.ne.s32.totalorder %s55, %s71
    %p73 = scmp.eq.s32.totalorder %s21, 0
    %p74 = por %p72, %p73
    %s76 = sadd.s32 %s75, 1
    %p79 = scmp.eq.s32.totalorder %s15, 1
    %p80 = scmp.ne.s32.totalorder %s75, %s77
    %p81 = scmp.eq.s32.totalorder %s15, 0
    %p82 = por %p80, %p81
    %p83 = scmp.ne.s32.totalorder %s75, %s77
    %p84 = scmp.eq.s32.totalorder %s20, 1
    %p85 = por %p83, %p84
    %p86 = scmp.ne.s32.totalorder %s77, %s78
    %p87 = scmp.eq.s32.totalorder %s20, 0
    %p88 = por %p86, %p87
    %p89 = scmp.ne.s32.totalorder %s77, %s78
    %p90 = scmp.eq.s32.totalorder %s21, 1
    %p91 = por %p89, %p90
    %p93 = scmp.ne.s32.totalorder %s78, %s92
    %p94 = scmp.eq.s32.totalorder %s21, 0
    %p95 = por %p93, %p94
    %s97 = sadd.s32 %s96, 1
    %p100 = scmp.eq.s32.totalorder %s15, 1
    %p101 = scmp.ne.s32.totalorder %s96, %s98
    %p102 = scmp.eq.s32.totalorder %s15, 0
    %p103 = por %p101, %p102
    %p104 = scmp.ne.s32.totalorder %s96, %s98
    %p105 = scmp.eq.s32.totalorder %s20, 1
    %p106 = por %p104, %p105
    %p107 = scmp.ne.s32.totalorder %s98, %s99
    %p108 = scmp.eq.s32.totalorder %s20, 0
    %p109 = por %p107, %p108
    %p110 = scmp.ne.s32.totalorder %s98, %s99
    %p111 = scmp.eq.s32.totalorder %s21, 1
    %p112 = por %p110, %p111
    %p114 = scmp.ne.s32.totalorder %s99, %s113
    %p115 = scmp.eq.s32.totalorder %s21, 0
    %p116 = por %p114, %p115
    %s118 = sadd.s32 %s117, 1
    %p121 = scmp.eq.s32.totalorder %s15, 1
    %p122 = scmp.ne.s32.totalorder %s117, %s119
    %p123 = scmp.eq.s32.totalorder %s15, 0
    %p124 = por %p122, %p123
    %p125 = scmp.ne.s32.totalorder %s117, %s119
    %p126 = scmp.eq.s32.totalorder %s20, 1
    %p127 = por %p125, %p126
    %p128 = scmp.ne.s32.totalorder %s119, %s120
    %p129 = scmp.eq.s32.totalorder %s20, 0
    %p130 = por %p128, %p129
    %p131 = scmp.ne.s32.totalorder %s119, %s120
    %p132 = scmp.eq.s32.totalorder %s21, 1
    %p133 = por %p131, %p132
    %p135 = scmp.ne.s32.totalorder %s120, %s134
    %p136 = scmp.eq.s32.totalorder %s21, 0
    %p137 = por %p135, %p136
    %s139 = sadd.s32 %s138, 1
    %p142 = scmp.eq.s32.totalorder %s15, 1
    %p143 = scmp.ne.s32.totalorder %s138, %s140
    %p144 = scmp.eq.s32.totalorder %s15, 0
    %p145 = por %p143, %p144
    %p146 = scmp.ne.s32.totalorder %s138, %s140
    %p147 = scmp.eq.s32.totalorder %s20, 1
    %p148 = por %p146, %p147
    %p149 = scmp.ne.s32.totalorder %s140, %s141
    %p150 = scmp.eq.s32.totalorder %s20, 0
    %p151 = por %p149, %p150
    %p152 = scmp.ne.s32.totalorder %s140, %s141
    %p153 = scmp.eq.s32.totalorder %s21, 1
    %p154 = por %p152, %p153
    %p156 = scmp.ne.s32.totalorder %s141, %s155
    %p157 = scmp.eq.s32.totalorder %s21, 0
    %p158 = por %p156, %p157
    %s160 = sadd.s32 %s159, 1
    %p163 = scmp.eq.s32.totalorder %s15, 1
    %p164 = scmp.ne.s32.totalorder %s159, %s161
    %p165 = scmp.eq.s32.totalorder %s15, 0
    %p166 = por %p164, %p165
    %p167 = scmp.ne.s32.totalorder %s159, %s161
    %p168 = scmp.eq.s32.totalorder %s20, 1
    %p169 = por %p167, %p168
    %p170 = scmp.ne.s32.totalorder %s161, %s162
    %p171 = scmp.eq.s32.totalorder %s20, 0
    %p172 = por %p170, %p171
    %p173 = scmp.ne.s32.totalorder %s161, %s162
    %p174 = scmp.eq.s32.totalorder %s21, 1
    %p175 = por %p173, %p174
    %p177 = scmp.ne.s32.totalorder %s162, %s176
    %p178 = scmp.eq.s32.totalorder %s21, 0
    %p179 = por %p177, %p178
    %s181 = sadd.s32 %s180, 1
    %p184 = scmp.eq.s32.totalorder %s15, 1
    %p185 = scmp.ne.s32.totalorder %s180, %s182
    %p186 = scmp.eq.s32.totalorder %s15, 0
    %p187 = por %p185, %p186
    %p188 = scmp.ne.s32.totalorder %s180, %s182
    %p189 = scmp.eq.s32.totalorder %s20, 1
    %p190 = por %p188, %p189
    %p191 = scmp.ne.s32.totalorder %s182, %s183
    %p192 = scmp.eq.s32.totalorder %s20, 0
    %p193 = por %p191, %p192
    %p194 = scmp.ne.s32.totalorder %s182, %s183
    %p195 = scmp.eq.s32.totalorder %s21, 1
    %p196 = por %p194, %p195
    %p198 = scmp.ne.s32.totalorder %s183, %s197
    %p199 = scmp.eq.s32.totalorder %s21, 0
    %p200 = por %p198, %p199
    %s202 = sadd.s32 %s201, 1
    %p205 = scmp.eq.s32.totalorder %s15, 1
    %p206 = scmp.ne.s32.totalorder %s201, %s203
    %p207 = scmp.eq.s32.totalorder %s15, 0
    %p208 = por %p206, %p207
    %p209 = scmp.ne.s32.totalorder %s201, %s203
    %p210 = scmp.eq.s32.totalorder %s20, 1
    %p211 = por %p209, %p210
    %p212 = scmp.ne.s32.totalorder %s203, %s204
    %p213 = scmp.eq.s32.totalorder %s20, 0
    %p214 = por %p212, %p213
    %p215 = scmp.ne.s32.totalorder %s203, %s204
    %p216 = scmp.eq.s32.totalorder %s21, 1
    %p217 = por %p215, %p216
    %p219 = scmp.ne.s32.totalorder %s204, %s218
    %p220 = scmp.eq.s32.totalorder %s21, 0
    %p221 = por %p219, %p220
    %s222 = ssub.s32 %s15, %s22
    %p223 = scmp.eq.s32.totalorder %s222, 0
    %s225 = sadd.s32 %s224, 1
    %s226 = scalar_select %p223, %s224, %s225
    %p229 = pneg %p223
    %p230 = scmp.eq.s32.totalorder %s15, 1
    %p231 = por %p229, %p230
    %p232 = scmp.ne.s32.totalorder %s224, %s227
    %p233 = scmp.eq.s32.totalorder %s15, 0
    %p234 = por %p232, %p233
    %p235 = scmp.ne.s32.totalorder %s224, %s227
    %p236 = scmp.eq.s32.totalorder %s20, 1
    %p237 = por %p235, %p236
    %p238 = scmp.ne.s32.totalorder %s227, %s228
    %p239 = scmp.eq.s32.totalorder %s20, 0
    %p240 = por %p238, %p239
    %p241 = scmp.ne.s32.totalorder %s227, %s228
    %p242 = scmp.eq.s32.totalorder %s21, 1
    %p243 = por %p241, %p242
    %p245 = scmp.ne.s32.totalorder %s228, %s244
    %p246 = scmp.eq.s32.totalorder %s21, 0
    %p247 = por %p245, %p246
    %p248 = scmp.le.s32.totalorder 1, %s15
    %p249 = scmp.lt.s32.totalorder %s15, 3
    %p250 = pnand %p248, %p249
    %p251 = pneg %p250
    // Predicated region
    $region9: #{greybox_forward.1} parent=5 // pred_check
      _
    $region10: #{greybox_forward.1} parent=5 // pred_check_branch
      %253 = sbr.rel (%p250) target = $region12
    $region11: #{greybox_forward.1} parent=5 // pred_region
      %s254 = ssub.s32 %s15, 1
      // Predicated region
      $region13: #{greybox_forward.1} parent=11 // pred_check
        %p255 = pneg %p88
      $region14: #{greybox_forward.1} parent=11 // pred_check_branch
        %257 = sbr.rel (%p255) target = $region16
      $region15: #{greybox_forward.1} parent=11 // pred_region
        _
      $region16: #{greybox_forward.1} parent=11 // pred_fallthru
        _
      // Predicated region
      $region17: #{greybox_forward.1} parent=11 // pred_check
        %p258 = pneg %p109
      $region18: #{greybox_forward.1} parent=11 // pred_check_branch
        %260 = sbr.rel (%p258) target = $region20
      $region19: #{greybox_forward.1} parent=11 // pred_region
        _
      $region20: #{greybox_forward.1} parent=11 // pred_fallthru
        _
      // Predicated region
      $region21: #{greybox_forward.1} parent=11 // pred_check
        %p261 = pneg %p130
      $region22: #{greybox_forward.1} parent=11 // pred_check_branch
        %263 = sbr.rel (%p261) target = $region24
      $region23: #{greybox_forward.1} parent=11 // pred_region
        _
      $region24: #{greybox_forward.1} parent=11 // pred_fallthru
        _
      // Predicated region
      $region25: #{greybox_forward.1} parent=11 // pred_check
        %p264 = pneg %p151
      $region26: #{greybox_forward.1} parent=11 // pred_check_branch
        %266 = sbr.rel (%p264) target = $region28
      $region27: #{greybox_forward.1} parent=11 // pred_region
        _
      $region28: #{greybox_forward.1} parent=11 // pred_fallthru
        _
      // Predicated region
      $region29: #{greybox_forward.1} parent=11 // pred_check
        %p267 = pneg %p172
      $region30: #{greybox_forward.1} parent=11 // pred_check_branch
        %269 = sbr.rel (%p267) target = $region32
      $region31: #{greybox_forward.1} parent=11 // pred_region
        _
      $region32: #{greybox_forward.1} parent=11 // pred_fallthru
        _
      // Predicated region
      $region33: #{greybox_forward.1} parent=11 // pred_check
        %p270 = pneg %p193
      $region34: #{greybox_forward.1} parent=11 // pred_check_branch
        %272 = sbr.rel (%p270) target = $region36
      $region35: #{greybox_forward.1} parent=11 // pred_region
        _
      $region36: #{greybox_forward.1} parent=11 // pred_fallthru
        _
      // Predicated region
      $region37: #{greybox_forward.1} parent=11 // pred_check
        %p273 = pneg %p214
      $region38: #{greybox_forward.1} parent=11 // pred_check_branch
        %275 = sbr.rel (%p273) target = $region40
      $region39: #{greybox_forward.1} parent=11 // pred_region
        _
      $region40: #{greybox_forward.1} parent=11 // pred_fallthru
        _
    $region12: #{greybox_forward.1} parent=5 // pred_fallthru
      _
    %p276 = scmp.lt.s32.totalorder %s15, 2
    // Predicated region
    $region41: #{greybox_forward.1} parent=5 // pred_check
      %p277 = pneg %p276
    $region42: #{greybox_forward.1} parent=5 // pred_check_branch
      %279 = sbr.rel (%p277) target = $region44
    $region43: #{greybox_forward.1} parent=5 // pred_region
      // Predicated region
      $region45: #{greybox_forward.1} parent=43 // pred_check
        %p280 = pneg %p35
      $region46: #{greybox_forward.1} parent=43 // pred_check_branch
        %282 = sbr.rel (%p280) target = $region48
      $region47: #{greybox_forward.1} parent=43 // pred_region
        %s283 = smul.u32 2, %s15
        %p284 = scmp.lt.s32.totalorder %s283, 3
        %s285 = scalar_select %p284, %s283, 3
        %s286 = smul.addr %s285, 2
        %s287 = scalar_lea.vmem %s0, %s286
        %s288 = smul.u32 2, %s15
      $region48: #{greybox_forward.1} parent=43 // pred_fallthru
        _
      // Predicated region
      $region49: #{greybox_forward.1} parent=43 // pred_check
        %p289 = pneg %p61
      $region50: #{greybox_forward.1} parent=43 // pred_check_branch
        %291 = sbr.rel (%p289) target = $region52
      $region51: #{greybox_forward.1} parent=43 // pred_region
        %s292 = smul.u32 2, %s15
        %p293 = scmp.lt.s32.totalorder %s292, 3
        %s294 = scalar_select %p293, %s292, 3
        %s295 = smul.addr %s294, 4
        %s296 = scalar_lea.vmem %s1, %s295
        %s297 = smul.u32 2, %s15
      $region52: #{greybox_forward.1} parent=43 // pred_fallthru
        _
    $region44: #{greybox_forward.1} parent=5 // pred_fallthru
      _
    %p298 = scmp.le.s32.totalorder 1, %s15
    %p299 = scmp.lt.s32.totalorder %s15, 3
    %p300 = pnand %p298, %p299
    %p301 = pneg %p300
    // Predicated region
    $region53: #{greybox_forward.1} parent=5 // pred_check
      _
    $region54: #{greybox_forward.1} parent=5 // pred_check_branch
      %303 = sbr.rel (%p300) target = $region56
    $region55: #{greybox_forward.1} parent=5 // pred_region
      %s304 = ssub.s32 %s15, 1
      %s305 = smul.u32 2, %s20
      %p306 = scmp.lt.s32.totalorder %s305, 3
      %s307 = scalar_select %p306, %s305, 3
      %s308 = smul.addr %s307, 2
      %s309 = scalar_lea.vmem %s0, %s308
      %p310 = pneg %p41
      %p311 = pneg %p38
      %s312 = smul.u32 2, %s20
      %p313 = scmp.lt.s32.totalorder %s312, 3
      %s314 = scalar_select %p313, %s312, 3
      %s315 = smul.addr %s314, 4
      %s316 = scalar_lea.vmem %s1, %s315
      %p317 = pneg %p67
      %p318 = pneg %p64
      %p319 = pneg %p88
      %p320 = pneg %p85
      %p321 = pneg %p109
      %p322 = pneg %p106
      %p323 = pneg %p130
      %p324 = pneg %p127
      %p325 = pneg %p151
      %p326 = pneg %p148
      %p327 = pneg %p172
      %p328 = pneg %p169
      %p329 = pneg %p193
      %p330 = pneg %p190
      %p331 = pneg %p214
      %p332 = pneg %p211
      %p333 = pneg %p240
      %p334 = pneg %p237
      %s335 = smul.u32 2, %s20
      %p336 = scmp.lt.s32.totalorder %s335, 3
      %s337 = scalar_select %p336, %s335, 3
      %s338 = smul.addr %s337, 4
      %s339 = scalar_lea.vmem %s9, %s338
      %s340 = smul.u32 2, %s20
      %p341 = scmp.lt.s32.totalorder %s340, 3
      %s342 = scalar_select %p341, %s340, 3
      %s343 = smul.addr %s342, 2
      %s344 = scalar_lea.vmem %s0, %s343
      %s345 = smul.u32 2, %s20
      %s346 = smul.u32 2, %s20
      %p347 = scmp.lt.s32.totalorder %s346, 3
      %s348 = scalar_select %p347, %s346, 3
      %s349 = smul.addr %s348, 4
      %s350 = scalar_lea.vmem %s1, %s349
      %s351 = smul.u32 2, %s20
      %s352 = smul.u32 2, %s20
      %p353 = scmp.lt.s32.totalorder %s352, 3
      %s354 = scalar_select %p353, %s352, 3
      %s355 = smul.addr %s354, 4
      %s356 = scalar_lea.vmem %s9, %s355
      %s357 = smul.u32 2, %s20
      %v358 = vld [vmem:[%s344] sm:$0xf]
      %v359 = vld [vmem:[%s350] sm:$0xff]
      %v360 = vld [vmem:[%s2] sm:$0xff]
      %v361 = vld [vmem:[%s2 + $0x8] sm:$0xff]
      %v362 = vld [vmem:[%s2 + $0x10] sm:$0xff]
      %v363 = vld [vmem:[%s2 + $0x18] sm:$0xff]
      %v364 = vld [vmem:[%s2 + $0x20] sm:$0xff]
      %v365 = vld [vmem:[%s2 + $0x28] sm:$0xff]
      %v366 = vld [vmem:[%s2 + $0x30] sm:$0xff]
      %v367 = vld [vmem:[%s2 + $0x38] sm:$0xff]
      %v368 = vld [vmem:[%s2 + $0x40] sm:$0xff]
      %v369 = vld [vmem:[%s2 + $0x48] sm:$0xff]
      %v370 = vld [vmem:[%s2 + $0x50] sm:$0xff]
      %v371 = vld [vmem:[%s2 + $0x58] sm:$0xff]
      %v372 = vld [vmem:[%s2 + $0x60] sm:$0xff]
      %v373 = vld [vmem:[%s2 + $0x68] sm:$0xff]
      %v374 = vld [vmem:[%s2 + $0x70] sm:$0xff]
      %v375 = vld [vmem:[%s2 + $0x78] sm:$0xff]
      %v376 = vld [vmem:[%s3] sm:$0xff]
      %v377 = vld [vmem:[%s3 + $0x8] sm:$0xff]
      %v378 = vld [vmem:[%s3 + $0x10] sm:$0xff]
      %v379 = vld [vmem:[%s3 + $0x18] sm:$0xff]
      %v380 = vld [vmem:[%s3 + $0x20] sm:$0xff]
      %v381 = vld [vmem:[%s3 + $0x28] sm:$0xff]
      %v382 = vld [vmem:[%s3 + $0x30] sm:$0xff]
      %v383 = vld [vmem:[%s3 + $0x38] sm:$0xff]
      %v384 = vld [vmem:[%s3 + $0x40] sm:$0xff]
      %v385 = vld [vmem:[%s3 + $0x48] sm:$0xff]
      %v386 = vld [vmem:[%s3 + $0x50] sm:$0xff]
      %v387 = vld [vmem:[%s3 + $0x58] sm:$0xff]
      %v388 = vld [vmem:[%s3 + $0x60] sm:$0xff]
      %v389 = vld [vmem:[%s3 + $0x68] sm:$0xff]
      %v390 = vld [vmem:[%s3 + $0x70] sm:$0xff]
      %v391 = vld [vmem:[%s3 + $0x78] sm:$0xff]
      %v393 = vcombine.high %v359, %v359
      %vm394 = vcmask 31744
      %v396 = vsel %vm394, %v376, 0
      %v399 = vsel %vm394, %v377, 0
      %v402 = vsel %vm394, %v378, 0
      %v405 = vsel %vm394, %v379, 0
      %v408 = vsel %vm394, %v380, 0
      %v411 = vsel %vm394, %v381, 0
      %v414 = vsel %vm394, %v382, 0
      %v417 = vsel %vm394, %v383, 0
      %v420 = vsel %vm394, %v384, 0
      %v423 = vsel %vm394, %v385, 0
      %v426 = vsel %vm394, %v386, 0
      %v429 = vsel %vm394, %v387, 0
      %v432 = vsel %vm394, %v388, 0
      %v435 = vsel %vm394, %v389, 0
      %v438 = vsel %vm394, %v390, 0
      %v441 = vsel %vm394, %v391, 0
      %vm443 = vcmask 1043456
      %v444 = vsel %vm443, %v359, 0
      %v446 = vsel %vm443, %v393, 0
      %448 = vmatprep.subr.mxu0 %v446
      %449 = vmatpush1.msra.mxu0 %v444
      %450 = vmatprep.subr.mxu0 0.0
      %451 = vmatpush1.msra.mxu0 0.0
      %452 = vmatprep.subr.mxu0 0.0
      %453 = vmatpush1.msra.mxu0 0.0
      %454 = vmatprep.subr.mxu0 0.0
      %455 = vmatpush1.msra.mxu0 0.0
      %456 = vmatprep.subr.mxu0 0.0
      %457 = vmatpush1.msra.mxu0 0.0
      %458 = vmatprep.subr.mxu0 0.0
      %459 = vmatpush1.msra.mxu0 0.0
      %460 = vmatprep.subr.mxu0 0.0
      %461 = vmatpush1.msra.mxu0 0.0
      %462 = vmatprep.subr.mxu0 0.0
      %463 = vmatpush1.msra.mxu0 0.0
      %464 = vmatprep.subr.mxu0 0.0
      %465 = vmatpush1.msra.mxu0 0.0
      %466 = vmatprep.subr.mxu0 0.0
      %467 = vmatpush1.msra.mxu0 0.0
      %468 = vmatprep.subr.mxu0 0.0
      %469 = vmatpush1.msra.mxu0 0.0
      %470 = vmatprep.subr.mxu0 0.0
      %471 = vmatpush1.msra.mxu0 0.0
      %472 = vmatprep.subr.mxu0 0.0
      %473 = vmatpush1.msra.mxu0 0.0
      %474 = vmatprep.subr.mxu0 0.0
      %475 = vmatpush1.msra.mxu0 0.0
      %476 = vmatprep.subr.mxu0 0.0
      %477 = vmatpush1.msra.mxu0 0.0
      %478 = vmatprep.subr.mxu0 0.0
      %479 = vmatpush1.msra.mxu0 0.0
      %480 = vmatprep.subr.mxu0 0.0
      %481 = vmatpush1.msra.mxu0 0.0
      %482 = vmatprep.subr.mxu0 0.0
      %483 = vmatpush1.msra.mxu0 0.0
      %484 = vmatprep.subr.mxu0 0.0
      %485 = vmatpush1.msra.mxu0 0.0
      %486 = vmatprep.subr.mxu0 0.0
      %487 = vmatpush1.msra.mxu0 0.0
      %488 = vmatprep.subr.mxu0 0.0
      %489 = vmatpush1.msra.mxu0 0.0
      %490 = vmatprep.subr.mxu0 0.0
      %491 = vmatpush1.msra.mxu0 0.0
      %492 = vmatprep.subr.mxu0 0.0
      %493 = vmatpush1.msra.mxu0 0.0
      %494 = vmatprep.subr.mxu0 0.0
      %495 = vmatpush1.msra.mxu0 0.0
      %496 = vmatprep.subr.mxu0 0.0
      %497 = vmatpush1.msra.mxu0 0.0
      %498 = vmatprep.subr.mxu0 0.0
      %499 = vmatpush1.msra.mxu0 0.0
      %500 = vmatprep.subr.mxu0 0.0
      %501 = vmatpush1.msra.mxu0 0.0
      %502 = vmatprep.subr.mxu0 0.0
      %503 = vmatpush1.msra.mxu0 0.0
      %504 = vmatprep.subr.mxu0 0.0
      %505 = vmatpush1.msra.mxu0 0.0
      %506 = vmatprep.subr.mxu0 0.0
      %507 = vmatpush1.msra.mxu0 0.0
      %508 = vmatprep.subr.mxu0 0.0
      %509 = vmatpush1.msra.mxu0 0.0
      %510 = vmatprep.subr.mxu0 0.0
      %511 = vmatpush1.msra.mxu0 0.0
      %512 = vmatprep.mubr.f32.mxu0 0.0
      %513 = vmatmul.mubr.f32.gmra.mrb[0].mxu0 %v396
      %v514 = vpop.f32.mrb[0].mxu0
      %v515 = vadd.f32 0.0, %v514
      %v516 = vpop.f32.mrb[0].mxu0
      %v517 = vadd.f32 0.0, %v516
      %518 = vmatprep.mubr.f32.mxu0 0.0
      %519 = vmatmul.mubr.f32.gmra.mrb[0].mxu0 %v399
      %v520 = vpop.f32.mrb[0].mxu0
      %v521 = vadd.f32 0.0, %v520
      %v522 = vpop.f32.mrb[0].mxu0
      %v523 = vadd.f32 0.0, %v522
      %524 = vmatprep.mubr.f32.mxu0 0.0
      %525 = vmatmul.mubr.f32.gmra.mrb[0].mxu0 %v402
      %v526 = vpop.f32.mrb[0].mxu0
      %v527 = vadd.f32 0.0, %v526
      %v528 = vpop.f32.mrb[0].mxu0
      %v529 = vadd.f32 0.0, %v528
      %530 = vmatprep.mubr.f32.mxu0 0.0
      %531 = vmatmul.mubr.f32.gmra.mrb[0].mxu0 %v405
      %v532 = vpop.f32.mrb[0].mxu0
      %v533 = vadd.f32 0.0, %v532
      %v534 = vpop.f32.mrb[0].mxu0
      %v535 = vadd.f32 0.0, %v534
      %536 = vmatprep.mubr.f32.mxu0 0.0
      %537 = vmatmul.mubr.f32.gmra.mrb[0].mxu0 %v408
      %v538 = vpop.f32.mrb[0].mxu0
      %v539 = vadd.f32 0.0, %v538
      %v540 = vpop.f32.mrb[0].mxu0
      %v541 = vadd.f32 0.0, %v540
      %542 = vmatprep.mubr.f32.mxu0 0.0
      %543 = vmatmul.mubr.f32.gmra.mrb[0].mxu0 %v411
      %v544 = vpop.f32.mrb[0].mxu0
      %v545 = vadd.f32 0.0, %v544
      %v546 = vpop.f32.mrb[0].mxu0
      %v547 = vadd.f32 0.0, %v546
      %548 = vmatprep.mubr.f32.mxu0 0.0
      %549 = vmatmul.mubr.f32.gmra.mrb[0].mxu0 %v414
      %v550 = vpop.f32.mrb[0].mxu0
      %v551 = vadd.f32 0.0, %v550
      %v552 = vpop.f32.mrb[0].mxu0
      %v553 = vadd.f32 0.0, %v552
      %554 = vmatprep.mubr.f32.mxu0 0.0
      %555 = vmatmul.mubr.f32.gmra.mrb[0].mxu0 %v417
      %v556 = vpop.f32.mrb[0].mxu0
      %v557 = vadd.f32 0.0, %v556
      %v558 = vpop.f32.mrb[0].mxu0
      %v559 = vadd.f32 0.0, %v558
      %560 = vmatprep.mubr.f32.mxu0 0.0
      %561 = vmatmul.mubr.f32.gmra.mrb[0].mxu0 %v420
      %v562 = vpop.f32.mrb[0].mxu0
      %v563 = vadd.f32 0.0, %v562
      %v564 = vpop.f32.mrb[0].mxu0
      %v565 = vadd.f32 0.0, %v564
      %566 = vmatprep.mubr.f32.mxu0 0.0
      %567 = vmatmul.mubr.f32.gmra.mrb[0].mxu0 %v423
      %v568 = vpop.f32.mrb[0].mxu0
      %v569 = vadd.f32 0.0, %v568
      %v570 = vpop.f32.mrb[0].mxu0
      %v571 = vadd.f32 0.0, %v570
      %572 = vmatprep.mubr.f32.mxu0 0.0
      %573 = vmatmul.mubr.f32.gmra.mrb[0].mxu0 %v426
      %v574 = vpop.f32.mrb[0].mxu0
      %v575 = vadd.f32 0.0, %v574
      %v576 = vpop.f32.mrb[0].mxu0
      %v577 = vadd.f32 0.0, %v576
      %578 = vmatprep.mubr.f32.mxu0 0.0
      %579 = vmatmul.mubr.f32.gmra.mrb[0].mxu0 %v429
      %v580 = vpop.f32.mrb[0].mxu0
      %v581 = vadd.f32 0.0, %v580
      %v582 = vpop.f32.mrb[0].mxu0
      %v583 = vadd.f32 0.0, %v582
      %584 = vmatprep.mubr.f32.mxu0 0.0
      %585 = vmatmul.mubr.f32.gmra.mrb[0].mxu0 %v432
      %v586 = vpop.f32.mrb[0].mxu0
      %v587 = vadd.f32 0.0, %v586
      %v588 = vpop.f32.mrb[0].mxu0
      %v589 = vadd.f32 0.0, %v588
      %590 = vmatprep.mubr.f32.mxu0 0.0
      %591 = vmatmul.mubr.f32.gmra.mrb[0].mxu0 %v435
      %v592 = vpop.f32.mrb[0].mxu0
      %v593 = vadd.f32 0.0, %v592
      %v594 = vpop.f32.mrb[0].mxu0
      %v595 = vadd.f32 0.0, %v594
      %596 = vmatprep.mubr.f32.mxu0 0.0
      %597 = vmatmul.mubr.f32.gmra.mrb[0].mxu0 %v438
      %v598 = vpop.f32.mrb[0].mxu0
      %v599 = vadd.f32 0.0, %v598
      %v600 = vpop.f32.mrb[0].mxu0
      %v601 = vadd.f32 0.0, %v600
      %602 = vmatprep.mubr.f32.mxu0 0.0
      %603 = vmatmul.mubr.f32.gmra.mrb[0].mxu0 %v441
      %v604 = vpop.f32.mrb[0].mxu0
      %v605 = vadd.f32 0.0, %v604
      %v606 = vpop.f32.mrb[0].mxu0
      %v607 = vadd.f32 0.0, %v606
      %608 = vdwg.mxu0
      %v611 = vunpack.c.l.s4 1983009808
      %v612 = vunpack.c.0.s8 %v611
      %v613 = vlaneseq
      %v614 = vshrl.u32 %v613, 7
      %v615 = vsub.s32 %v612, %v614
      %v616 = vrot.slane %v358, %v615
      %v617 = vcombine.high %v616, %v616
      %vm618 = vcmask 15360
      %v620 = vsel %vm618, %v360, 0
      %v623 = vsel %vm618, %v361, 0
      %v626 = vsel %vm618, %v362, 0
      %v629 = vsel %vm618, %v363, 0
      %v632 = vsel %vm618, %v364, 0
      %v635 = vsel %vm618, %v365, 0
      %v638 = vsel %vm618, %v366, 0
      %v641 = vsel %vm618, %v367, 0
      %v644 = vsel %vm618, %v368, 0
      %v647 = vsel %vm618, %v369, 0
      %v650 = vsel %vm618, %v370, 0
      %v653 = vsel %vm618, %v371, 0
      %v656 = vsel %vm618, %v372, 0
      %v659 = vsel %vm618, %v373, 0
      %v662 = vsel %vm618, %v374, 0
      %v665 = vsel %vm618, %v375, 0
      %vm667 = vcmask 1041408
      %v668 = vsel %vm667, %v616, 0
      %v670 = vsel %vm667, %v617, 0
      %672 = vmatprep.subr.mxu0 %v670
      %673 = vmatpush1.msra.mxu0 %v668
      %674 = vmatprep.subr.mxu0 0.0
      %675 = vmatpush1.msra.mxu0 0.0
      %676 = vmatprep.subr.mxu0 0.0
      %677 = vmatpush1.msra.mxu0 0.0
      %678 = vmatprep.subr.mxu0 0.0
      %679 = vmatpush1.msra.mxu0 0.0
      %680 = vmatprep.subr.mxu0 0.0
      %681 = vmatpush1.msra.mxu0 0.0
      %682 = vmatprep.subr.mxu0 0.0
      %683 = vmatpush1.msra.mxu0 0.0
      %684 = vmatprep.subr.mxu0 0.0
      %685 = vmatpush1.msra.mxu0 0.0
      %686 = vmatprep.subr.mxu0 0.0
      %687 = vmatpush1.msra.mxu0 0.0
      %688 = vmatprep.subr.mxu0 0.0
      %689 = vmatpush1.msra.mxu0 0.0
      %690 = vmatprep.subr.mxu0 0.0
      %691 = vmatpush1.msra.mxu0 0.0
      %692 = vmatprep.subr.mxu0 0.0
      %693 = vmatpush1.msra.mxu0 0.0
      %694 = vmatprep.subr.mxu0 0.0
      %695 = vmatpush1.msra.mxu0 0.0
      %696 = vmatprep.subr.mxu0 0.0
      %697 = vmatpush1.msra.mxu0 0.0
      %698 = vmatprep.subr.mxu0 0.0
      %699 = vmatpush1.msra.mxu0 0.0
      %700 = vmatprep.subr.mxu0 0.0
      %701 = vmatpush1.msra.mxu0 0.0
      %702 = vmatprep.subr.mxu0 0.0
      %703 = vmatpush1.msra.mxu0 0.0
      %704 = vmatprep.subr.mxu0 0.0
      %705 = vmatpush1.msra.mxu0 0.0
      %706 = vmatprep.subr.mxu0 0.0
      %707 = vmatpush1.msra.mxu0 0.0
      %708 = vmatprep.subr.mxu0 0.0
      %709 = vmatpush1.msra.mxu0 0.0
      %710 = vmatprep.subr.mxu0 0.0
      %711 = vmatpush1.msra.mxu0 0.0
      %712 = vmatprep.subr.mxu0 0.0
      %713 = vmatpush1.msra.mxu0 0.0
      %714 = vmatprep.subr.mxu0 0.0
      %715 = vmatpush1.msra.mxu0 0.0
      %716 = vmatprep.subr.mxu0 0.0
      %717 = vmatpush1.msra.mxu0 0.0
      %718 = vmatprep.subr.mxu0 0.0
      %719 = vmatpush1.msra.mxu0 0.0
      %720 = vmatprep.subr.mxu0 0.0
      %721 = vmatpush1.msra.mxu0 0.0
      %722 = vmatprep.subr.mxu0 0.0
      %723 = vmatpush1.msra.mxu0 0.0
      %724 = vmatprep.subr.mxu0 0.0
      %725 = vmatpush1.msra.mxu0 0.0
      %726 = vmatprep.subr.mxu0 0.0
      %727 = vmatpush1.msra.mxu0 0.0
      %728 = vmatprep.subr.mxu0 0.0
      %729 = vmatpush1.msra.mxu0 0.0
      %730 = vmatprep.subr.mxu0 0.0
      %731 = vmatpush1.msra.mxu0 0.0
      %732 = vmatprep.subr.mxu0 0.0
      %733 = vmatpush1.msra.mxu0 0.0
      %734 = vmatprep.subr.mxu0 0.0
      %735 = vmatpush1.msra.mxu0 0.0
      %736 = vmatprep.mubr.f32.mxu0 0.0
      %737 = vmatmul.mubr.f32.gmra.mrb[0].mxu0 %v620
      %v738 = vpop.f32.mrb[0].mxu0
      %v739 = vadd.f32 %v515, %v738
      %v740 = vpop.f32.mrb[0].mxu0
      %v741 = vadd.f32 %v517, %v740
      %742 = vmatprep.mubr.f32.mxu0 0.0
      %743 = vmatmul.mubr.f32.gmra.mrb[0].mxu0 %v623
      %v744 = vpop.f32.mrb[0].mxu0
      %v745 = vadd.f32 %v521, %v744
      %v746 = vpop.f32.mrb[0].mxu0
      %v747 = vadd.f32 %v523, %v746
      %748 = vmatprep.mubr.f32.mxu0 0.0
      %749 = vmatmul.mubr.f32.gmra.mrb[0].mxu0 %v626
      %v750 = vpop.f32.mrb[0].mxu0
      %v751 = vadd.f32 %v527, %v750
      %v752 = vpop.f32.mrb[0].mxu0
      %v753 = vadd.f32 %v529, %v752
      %754 = vmatprep.mubr.f32.mxu0 0.0
      %755 = vmatmul.mubr.f32.gmra.mrb[0].mxu0 %v629
      %v756 = vpop.f32.mrb[0].mxu0
      %v757 = vadd.f32 %v533, %v756
      %v758 = vpop.f32.mrb[0].mxu0
      %v759 = vadd.f32 %v535, %v758
      %760 = vmatprep.mubr.f32.mxu0 0.0
      %761 = vmatmul.mubr.f32.gmra.mrb[0].mxu0 %v632
      %v762 = vpop.f32.mrb[0].mxu0
      %v763 = vadd.f32 %v539, %v762
      %v764 = vpop.f32.mrb[0].mxu0
      %v765 = vadd.f32 %v541, %v764
      %766 = vmatprep.mubr.f32.mxu0 0.0
      %767 = vmatmul.mubr.f32.gmra.mrb[0].mxu0 %v635
      %v768 = vpop.f32.mrb[0].mxu0
      %v769 = vadd.f32 %v545, %v768
      %v770 = vpop.f32.mrb[0].mxu0
      %v771 = vadd.f32 %v547, %v770
      %772 = vmatprep.mubr.f32.mxu0 0.0
      %773 = vmatmul.mubr.f32.gmra.mrb[0].mxu0 %v638
      %v774 = vpop.f32.mrb[0].mxu0
      %v775 = vadd.f32 %v551, %v774
      %v776 = vpop.f32.mrb[0].mxu0
      %v777 = vadd.f32 %v553, %v776
      %778 = vmatprep.mubr.f32.mxu0 0.0
      %779 = vmatmul.mubr.f32.gmra.mrb[0].mxu0 %v641
      %v780 = vpop.f32.mrb[0].mxu0
      %v781 = vadd.f32 %v557, %v780
      %v782 = vpop.f32.mrb[0].mxu0
      %v783 = vadd.f32 %v559, %v782
      %784 = vmatprep.mubr.f32.mxu0 0.0
      %785 = vmatmul.mubr.f32.gmra.mrb[0].mxu0 %v644
      %v786 = vpop.f32.mrb[0].mxu0
      %v787 = vadd.f32 %v563, %v786
      %v788 = vpop.f32.mrb[0].mxu0
      %v789 = vadd.f32 %v565, %v788
      %790 = vmatprep.mubr.f32.mxu0 0.0
      %791 = vmatmul.mubr.f32.gmra.mrb[0].mxu0 %v647
      %v792 = vpop.f32.mrb[0].mxu0
      %v793 = vadd.f32 %v569, %v792
      %v794 = vpop.f32.mrb[0].mxu0
      %v795 = vadd.f32 %v571, %v794
      %796 = vmatprep.mubr.f32.mxu0 0.0
      %797 = vmatmul.mubr.f32.gmra.mrb[0].mxu0 %v650
      %v798 = vpop.f32.mrb[0].mxu0
      %v799 = vadd.f32 %v575, %v798
      %v800 = vpop.f32.mrb[0].mxu0
      %v801 = vadd.f32 %v577, %v800
      %802 = vmatprep.mubr.f32.mxu0 0.0
      %803 = vmatmul.mubr.f32.gmra.mrb[0].mxu0 %v653
      %v804 = vpop.f32.mrb[0].mxu0
      %v805 = vadd.f32 %v581, %v804
      %v806 = vpop.f32.mrb[0].mxu0
      %v807 = vadd.f32 %v583, %v806
      %808 = vmatprep.mubr.f32.mxu0 0.0
      %809 = vmatmul.mubr.f32.gmra.mrb[0].mxu0 %v656
      %v810 = vpop.f32.mrb[0].mxu0
      %v811 = vadd.f32 %v587, %v810
      %v812 = vpop.f32.mrb[0].mxu0
      %v813 = vadd.f32 %v589, %v812
      %814 = vmatprep.mubr.f32.mxu0 0.0
      %815 = vmatmul.mubr.f32.gmra.mrb[0].mxu0 %v659
      %v816 = vpop.f32.mrb[0].mxu0
      %v817 = vadd.f32 %v593, %v816
      %v818 = vpop.f32.mrb[0].mxu0
      %v819 = vadd.f32 %v595, %v818
      %820 = vmatprep.mubr.f32.mxu0 0.0
      %821 = vmatmul.mubr.f32.gmra.mrb[0].mxu0 %v662
      %v822 = vpop.f32.mrb[0].mxu0
      %v823 = vadd.f32 %v599, %v822
      %v824 = vpop.f32.mrb[0].mxu0
      %v825 = vadd.f32 %v601, %v824
      %826 = vmatprep.mubr.f32.mxu0 0.0
      %827 = vmatmul.mubr.f32.gmra.mrb[0].mxu0 %v665
      %v828 = vpop.f32.mrb[0].mxu0
      %v829 = vadd.f32 %v605, %v828
      %v830 = vpop.f32.mrb[0].mxu0
      %v831 = vadd.f32 %v607, %v830
      %832 = vdwg.mxu0
      %v833 = vld [vmem:[%s4] sm:$0xff]
      %v834 = vld [vmem:[%s4 + $0x8] sm:$0xff]
      %v835 = vld [vmem:[%s4 + $0x10] sm:$0xff]
      %v836 = vld [vmem:[%s4 + $0x18] sm:$0xff]
      %v837 = vld [vmem:[%s4 + $0x20] sm:$0xff]
      %v838 = vld [vmem:[%s4 + $0x28] sm:$0xff]
      %v839 = vld [vmem:[%s4 + $0x30] sm:$0xff]
      %v840 = vld [vmem:[%s4 + $0x38] sm:$0xff]
      %v841 = vld [vmem:[%s4 + $0x40] sm:$0xff]
      %v842 = vld [vmem:[%s4 + $0x48] sm:$0xff]
      %v843 = vld [vmem:[%s4 + $0x50] sm:$0xff]
      %v844 = vld [vmem:[%s4 + $0x58] sm:$0xff]
      %v845 = vld [vmem:[%s4 + $0x60] sm:$0xff]
      %v846 = vld [vmem:[%s4 + $0x68] sm:$0xff]
      %v847 = vld [vmem:[%s4 + $0x70] sm:$0xff]
      %v848 = vld [vmem:[%s4 + $0x78] sm:$0xff]
      %850 = vset.pattern.permute.xlu0 0
      %851 = vperm.xlu0 %850, %v833
      %v852 = vpop.permute.xlu0 %851
      %855 = vset.pattern.permute.xlu0 0
      %856 = vperm.xlu0 %855, %v834
      %v857 = vpop.permute.xlu0 %856
      %860 = vset.pattern.permute.xlu0 0
      %861 = vperm.xlu0 %860, %v835
      %v862 = vpop.permute.xlu0 %861
      %865 = vset.pattern.permute.xlu0 0
      %866 = vperm.xlu0 %865, %v836
      %v867 = vpop.permute.xlu0 %866
      %870 = vset.pattern.permute.xlu0 0
      %871 = vperm.xlu0 %870, %v837
      %v872 = vpop.permute.xlu0 %871
      %875 = vset.pattern.permute.xlu0 0
      %876 = vperm.xlu0 %875, %v838
      %v877 = vpop.permute.xlu0 %876
      %880 = vset.pattern.permute.xlu0 0
      %881 = vperm.xlu0 %880, %v839
      %v882 = vpop.permute.xlu0 %881
      %885 = vset.pattern.permute.xlu0 0
      %886 = vperm.xlu0 %885, %v840
      %v887 = vpop.permute.xlu0 %886
      %890 = vset.pattern.permute.xlu0 0
      %891 = vperm.xlu0 %890, %v841
      %v892 = vpop.permute.xlu0 %891
      %895 = vset.pattern.permute.xlu0 0
      %896 = vperm.xlu0 %895, %v842
      %v897 = vpop.permute.xlu0 %896
      %900 = vset.pattern.permute.xlu0 0
      %901 = vperm.xlu0 %900, %v843
      %v902 = vpop.permute.xlu0 %901
      %905 = vset.pattern.permute.xlu0 0
      %906 = vperm.xlu0 %905, %v844
      %v907 = vpop.permute.xlu0 %906
      %910 = vset.pattern.permute.xlu0 0
      %911 = vperm.xlu0 %910, %v845
      %v912 = vpop.permute.xlu0 %911
      %915 = vset.pattern.permute.xlu0 0
      %916 = vperm.xlu0 %915, %v846
      %v917 = vpop.permute.xlu0 %916
      %920 = vset.pattern.permute.xlu0 0
      %921 = vperm.xlu0 %920, %v847
      %v922 = vpop.permute.xlu0 %921
      %925 = vset.pattern.permute.xlu0 0
      %926 = vperm.xlu0 %925, %v848
      %v927 = vpop.permute.xlu0 %926
      %v929 = vadd.f32 %v739, %v852
      %v930 = vadd.f32 %v741, %v852
      %v931 = vadd.f32 %v745, %v857
      %v932 = vadd.f32 %v747, %v857
      %v933 = vadd.f32 %v751, %v862
      %v934 = vadd.f32 %v753, %v862
      %v935 = vadd.f32 %v757, %v867
      %v936 = vadd.f32 %v759, %v867
      %v937 = vadd.f32 %v763, %v872
      %v938 = vadd.f32 %v765, %v872
      %v939 = vadd.f32 %v769, %v877
      %v940 = vadd.f32 %v771, %v877
      %v941 = vadd.f32 %v775, %v882
      %v942 = vadd.f32 %v777, %v882
      %v943 = vadd.f32 %v781, %v887
      %v944 = vadd.f32 %v783, %v887
      %v945 = vadd.f32 %v787, %v892
      %v946 = vadd.f32 %v789, %v892
      %v947 = vadd.f32 %v793, %v897
      %v948 = vadd.f32 %v795, %v897
      %v949 = vadd.f32 %v799, %v902
      %v950 = vadd.f32 %v801, %v902
      %v951 = vadd.f32 %v805, %v907
      %v952 = vadd.f32 %v807, %v907
      %v953 = vadd.f32 %v811, %v912
      %v954 = vadd.f32 %v813, %v912
      %v955 = vadd.f32 %v817, %v917
      %v956 = vadd.f32 %v819, %v917
      %v957 = vadd.f32 %v823, %v922
      %v958 = vadd.f32 %v825, %v922
      %v959 = vadd.f32 %v829, %v927
      %v960 = vadd.f32 %v831, %v927
      %v961 = vtanh.pop %v929
      %v962 = vtanh.pop %v930
      %v963 = vtanh.pop %v931
      %v964 = vtanh.pop %v932
      %v965 = vtanh.pop %v933
      %v966 = vtanh.pop %v934
      %v967 = vtanh.pop %v935
      %v968 = vtanh.pop %v936
      %v969 = vtanh.pop %v937
      %v970 = vtanh.pop %v938
      %v971 = vtanh.pop %v939
      %v972 = vtanh.pop %v940
      %v973 = vtanh.pop %v941
      %v974 = vtanh.pop %v942
      %v975 = vtanh.pop %v943
      %v976 = vtanh.pop %v944
      %v977 = vtanh.pop %v945
      %v978 = vtanh.pop %v946
      %v979 = vtanh.pop %v947
      %v980 = vtanh.pop %v948
      %v981 = vtanh.pop %v949
      %v982 = vtanh.pop %v950
      %v983 = vtanh.pop %v951
      %v984 = vtanh.pop %v952
      %v985 = vtanh.pop %v953
      %v986 = vtanh.pop %v954
      %v987 = vtanh.pop %v955
      %v988 = vtanh.pop %v956
      %v989 = vtanh.pop %v957
      %v990 = vtanh.pop %v958
      %v991 = vtanh.pop %v959
      %v992 = vtanh.pop %v960
      %v993 = vld [vmem:[%s5] sm:$0xf]
      %v994 = vld [vmem:[%s6] sm:$0xf]
      %996 = vset.pattern.permute.xlu0 0
      %997 = vperm.xlu0 %996, %v994
      %v998 = vpop.permute.xlu0 %997
      %1000 = vmatprep.subr.mxu0 %v962
      %1001 = vmatpush1.msra.mxu0 %v961
      %1002 = vmatprep.subr.mxu0 %v964
      %1003 = vmatpush1.msra.mxu0 %v963
      %1004 = vmatprep.subr.mxu0 %v966
      %1005 = vmatpush1.msra.mxu0 %v965
      %1006 = vmatprep.subr.mxu0 %v968
      %1007 = vmatpush1.msra.mxu0 %v967
      %1008 = vmatprep.subr.mxu0 %v970
      %1009 = vmatpush1.msra.mxu0 %v969
      %1010 = vmatprep.subr.mxu0 %v972
      %1011 = vmatpush1.msra.mxu0 %v971
      %1012 = vmatprep.subr.mxu0 %v974
      %1013 = vmatpush1.msra.mxu0 %v973
      %1014 = vmatprep.subr.mxu0 %v976
      %1015 = vmatpush1.msra.mxu0 %v975
      %1016 = vmatprep.subr.mxu0 %v978
      %1017 = vmatpush1.msra.mxu0 %v977
      %1018 = vmatprep.subr.mxu0 %v980
      %1019 = vmatpush1.msra.mxu0 %v979
      %1020 = vmatprep.subr.mxu0 %v982
      %1021 = vmatpush1.msra.mxu0 %v981
      %1022 = vmatprep.subr.mxu0 %v984
      %1023 = vmatpush1.msra.mxu0 %v983
      %1024 = vmatprep.subr.mxu0 %v986
      %1025 = vmatpush1.msra.mxu0 %v985
      %1026 = vmatprep.subr.mxu0 %v988
      %1027 = vmatpush1.msra.mxu0 %v987
      %1028 = vmatprep.subr.mxu0 %v990
      %1029 = vmatpush1.msra.mxu0 %v989
      %1030 = vmatprep.subr.mxu0 %v992
      %1031 = vmatpush1.msra.mxu0 %v991
      %1032 = vmatprep.subr.mxu0 0.0
      %1033 = vmatpush1.msra.mxu0 0.0
      %1034 = vmatprep.subr.mxu0 0.0
      %1035 = vmatpush1.msra.mxu0 0.0
      %1036 = vmatprep.subr.mxu0 0.0
      %1037 = vmatpush1.msra.mxu0 0.0
      %1038 = vmatprep.subr.mxu0 0.0
      %1039 = vmatpush1.msra.mxu0 0.0
      %1040 = vmatprep.subr.mxu0 0.0
      %1041 = vmatpush1.msra.mxu0 0.0
      %1042 = vmatprep.subr.mxu0 0.0
      %1043 = vmatpush1.msra.mxu0 0.0
      %1044 = vmatprep.subr.mxu0 0.0
      %1045 = vmatpush1.msra.mxu0 0.0
      %1046 = vmatprep.subr.mxu0 0.0
      %1047 = vmatpush1.msra.mxu0 0.0
      %1048 = vmatprep.subr.mxu0 0.0
      %1049 = vmatpush1.msra.mxu0 0.0
      %1050 = vmatprep.subr.mxu0 0.0
      %1051 = vmatpush1.msra.mxu0 0.0
      %1052 = vmatprep.subr.mxu0 0.0
      %1053 = vmatpush1.msra.mxu0 0.0
      %1054 = vmatprep.subr.mxu0 0.0
      %1055 = vmatpush1.msra.mxu0 0.0
      %1056 = vmatprep.subr.mxu0 0.0
      %1057 = vmatpush1.msra.mxu0 0.0
      %1058 = vmatprep.subr.mxu0 0.0
      %1059 = vmatpush1.msra.mxu0 0.0
      %1060 = vmatprep.subr.mxu0 0.0
      %1061 = vmatpush1.msra.mxu0 0.0
      %1062 = vmatprep.subr.mxu0 0.0
      %1063 = vmatpush1.msra.mxu0 0.0
      %1064 = vmatprep.mubr.f32.mxu0 0.0
      %1065 = vmatmul.mubr.f32.gmra.mrb[0].mxu0 %v993
      %v1066 = vpop.f32.mrb[0].mxu0
      %v1067 = vadd.f32 %v998, %v1066
      %v1068 = vpop.f32.mrb[0].mxu0
      %v1069 = vadd.f32 %v998, %v1068
      %1070 = vdwg.mxu0
      %vm1071 = vcmp.gt.f32.partialorder %v1067, 20.0
      %vm1072 = vcmp.gt.f32.partialorder %v1069, 20.0
      %v1073 = vmin.f32 %v1067, 20.0
      %v1074 = vmin.f32 %v1069, 20.0
      %v1075 = vmul.f32 %v1073, 1.442695
      %v1076 = vpow.pop %v1075
      %v1077 = vmul.f32 %v1074, 1.442695
      %v1078 = vpow.pop %v1077
      %v1079 = vadd.f32 %v1076, 1.0
      %v1080 = vlog2.pop %v1079
      %v1081 = vmul.f32 %v1080, 0.6931472
      %v1082 = vmul.f32 -0.5, %v1076
      %v1083 = vadd.f32 %v1082, 1.0
      %v1084 = vmul.f32 %v1083, %v1076
      %v1085 = vand.u32 2147483647, %v1076
      %vm1086 = vcmp.lt.f32.partialorder %v1085, 0.0004427343
      %v1087 = vsel %vm1086, %v1084, %v1081
      %v1088 = vadd.f32 %v1078, 1.0
      %v1089 = vlog2.pop %v1088
      %v1090 = vmul.f32 %v1089, 0.6931472
      %v1091 = vmul.f32 -0.5, %v1078
      %v1092 = vadd.f32 %v1091, 1.0
      %v1093 = vmul.f32 %v1092, %v1078
      %v1094 = vand.u32 2147483647, %v1078
      %vm1095 = vcmp.lt.f32.partialorder %v1094, 0.0004427343
      %v1096 = vsel %vm1095, %v1093, %v1090
      %v1097 = vsel %vm1071, %v1067, %v1087
      %v1098 = vsel %vm1072, %v1069, %v1096
      %v1099 = vrcp.pop %v1097
      %v1100 = vrcp.pop %v1098
      %v1101 = vmul.f32 %v1097, %v1099
      %v1102 = vmul.f32 %v1098, %v1100
      %v1103 = vsub.f32 2.0, %v1101
      %v1104 = vsub.f32 2.0, %v1102
      %v1105 = vmul.f32 %v1099, %v1103
      %v1106 = vmul.f32 %v1100, %v1104
      %v1107 = vld [vmem:[%s7] sm:$0xf]
      %v1108 = vld [vmem:[%s8] sm:$0xf]
      %v1110 = vsel %vm394, %v1108, 0
      %1112 = vmatprep.subr.mxu0 %v446
      %1113 = vmatpush1.msra.mxu0 %v444
      %1114 = vmatprep.subr.mxu0 0.0
      %1115 = vmatpush1.msra.mxu0 0.0
      %1116 = vmatprep.subr.mxu0 0.0
      %1117 = vmatpush1.msra.mxu0 0.0
      %1118 = vmatprep.subr.mxu0 0.0
      %1119 = vmatpush1.msra.mxu0 0.0
      %1120 = vmatprep.subr.mxu0 0.0
      %1121 = vmatpush1.msra.mxu0 0.0
      %1122 = vmatprep.subr.mxu0 0.0
      %1123 = vmatpush1.msra.mxu0 0.0
      %1124 = vmatprep.subr.mxu0 0.0
      %1125 = vmatpush1.msra.mxu0 0.0
      %1126 = vmatprep.subr.mxu0 0.0
      %1127 = vmatpush1.msra.mxu0 0.0
      %1128 = vmatprep.subr.mxu0 0.0
      %1129 = vmatpush1.msra.mxu0 0.0
      %1130 = vmatprep.subr.mxu0 0.0
      %1131 = vmatpush1.msra.mxu0 0.0
      %1132 = vmatprep.subr.mxu0 0.0
      %1133 = vmatpush1.msra.mxu0 0.0
      %1134 = vmatprep.subr.mxu0 0.0
      %1135 = vmatpush1.msra.mxu0 0.0
      %1136 = vmatprep.subr.mxu0 0.0
      %1137 = vmatpush1.msra.mxu0 0.0
      %1138 = vmatprep.subr.mxu0 0.0
      %1139 = vmatpush1.msra.mxu0 0.0
      %1140 = vmatprep.subr.mxu0 0.0
      %1141 = vmatpush1.msra.mxu0 0.0
      %1142 = vmatprep.subr.mxu0 0.0
      %1143 = vmatpush1.msra.mxu0 0.0
      %1144 = vmatprep.subr.mxu0 0.0
      %1145 = vmatpush1.msra.mxu0 0.0
      %1146 = vmatprep.subr.mxu0 0.0
      %1147 = vmatpush1.msra.mxu0 0.0
      %1148 = vmatprep.subr.mxu0 0.0
      %1149 = vmatpush1.msra.mxu0 0.0
      %1150 = vmatprep.subr.mxu0 0.0
      %1151 = vmatpush1.msra.mxu0 0.0
      %1152 = vmatprep.subr.mxu0 0.0
      %1153 = vmatpush1.msra.mxu0 0.0
      %1154 = vmatprep.subr.mxu0 0.0
      %1155 = vmatpush1.msra.mxu0 0.0
      %1156 = vmatprep.subr.mxu0 0.0
      %1157 = vmatpush1.msra.mxu0 0.0
      %1158 = vmatprep.subr.mxu0 0.0
      %1159 = vmatpush1.msra.mxu0 0.0
      %1160 = vmatprep.subr.mxu0 0.0
      %1161 = vmatpush1.msra.mxu0 0.0
      %1162 = vmatprep.subr.mxu0 0.0
      %1163 = vmatpush1.msra.mxu0 0.0
      %1164 = vmatprep.subr.mxu0 0.0
      %1165 = vmatpush1.msra.mxu0 0.0
      %1166 = vmatprep.subr.mxu0 0.0
      %1167 = vmatpush1.msra.mxu0 0.0
      %1168 = vmatprep.subr.mxu0 0.0
      %1169 = vmatpush1.msra.mxu0 0.0
      %1170 = vmatprep.subr.mxu0 0.0
      %1171 = vmatpush1.msra.mxu0 0.0
      %1172 = vmatprep.subr.mxu0 0.0
      %1173 = vmatpush1.msra.mxu0 0.0
      %1174 = vmatprep.subr.mxu0 0.0
      %1175 = vmatpush1.msra.mxu0 0.0
      %1176 = vmatprep.mubr.f32.mxu0 0.0
      %1177 = vmatmul.mubr.f32.gmra.mrb[0].mxu0 %v1110
      %v1178 = vpop.f32.mrb[0].mxu0
      %v1179 = vadd.f32 0.0, %v1178
      %v1180 = vpop.f32.mrb[0].mxu0
      %v1181 = vadd.f32 0.0, %v1180
      %1182 = vdwg.mxu0
      %v1184 = vsel %vm618, %v1107, 0
      %1186 = vmatprep.subr.mxu0 %v670
      %1187 = vmatpush1.msra.mxu0 %v668
      %1188 = vmatprep.subr.mxu0 0.0
      %1189 = vmatpush1.msra.mxu0 0.0
      %1190 = vmatprep.subr.mxu0 0.0
      %1191 = vmatpush1.msra.mxu0 0.0
      %1192 = vmatprep.subr.mxu0 0.0
      %1193 = vmatpush1.msra.mxu0 0.0
      %1194 = vmatprep.subr.mxu0 0.0
      %1195 = vmatpush1.msra.mxu0 0.0
      %1196 = vmatprep.subr.mxu0 0.0
      %1197 = vmatpush1.msra.mxu0 0.0
      %1198 = vmatprep.subr.mxu0 0.0
      %1199 = vmatpush1.msra.mxu0 0.0
      %1200 = vmatprep.subr.mxu0 0.0
      %1201 = vmatpush1.msra.mxu0 0.0
      %1202 = vmatprep.subr.mxu0 0.0
      %1203 = vmatpush1.msra.mxu0 0.0
      %1204 = vmatprep.subr.mxu0 0.0
      %1205 = vmatpush1.msra.mxu0 0.0
      %1206 = vmatprep.subr.mxu0 0.0
      %1207 = vmatpush1.msra.mxu0 0.0
      %1208 = vmatprep.subr.mxu0 0.0
      %1209 = vmatpush1.msra.mxu0 0.0
      %1210 = vmatprep.subr.mxu0 0.0
      %1211 = vmatpush1.msra.mxu0 0.0
      %1212 = vmatprep.subr.mxu0 0.0
      %1213 = vmatpush1.msra.mxu0 0.0
      %1214 = vmatprep.subr.mxu0 0.0
      %1215 = vmatpush1.msra.mxu0 0.0
      %1216 = vmatprep.subr.mxu0 0.0
      %1217 = vmatpush1.msra.mxu0 0.0
      %1218 = vmatprep.subr.mxu0 0.0
      %1219 = vmatpush1.msra.mxu0 0.0
      %1220 = vmatprep.subr.mxu0 0.0
      %1221 = vmatpush1.msra.mxu0 0.0
      %1222 = vmatprep.subr.mxu0 0.0
      %1223 = vmatpush1.msra.mxu0 0.0
      %1224 = vmatprep.subr.mxu0 0.0
      %1225 = vmatpush1.msra.mxu0 0.0
      %1226 = vmatprep.subr.mxu0 0.0
      %1227 = vmatpush1.msra.mxu0 0.0
      %1228 = vmatprep.subr.mxu0 0.0
      %1229 = vmatpush1.msra.mxu0 0.0
      %1230 = vmatprep.subr.mxu0 0.0
      %1231 = vmatpush1.msra.mxu0 0.0
      %1232 = vmatprep.subr.mxu0 0.0
      %1233 = vmatpush1.msra.mxu0 0.0
      %1234 = vmatprep.subr.mxu0 0.0
      %1235 = vmatpush1.msra.mxu0 0.0
      %1236 = vmatprep.subr.mxu0 0.0
      %1237 = vmatpush1.msra.mxu0 0.0
      %1238 = vmatprep.subr.mxu0 0.0
      %1239 = vmatpush1.msra.mxu0 0.0
      %1240 = vmatprep.subr.mxu0 0.0
      %1241 = vmatpush1.msra.mxu0 0.0
      %1242 = vmatprep.subr.mxu0 0.0
      %1243 = vmatpush1.msra.mxu0 0.0
      %1244 = vmatprep.subr.mxu0 0.0
      %1245 = vmatpush1.msra.mxu0 0.0
      %1246 = vmatprep.subr.mxu0 0.0
      %1247 = vmatpush1.msra.mxu0 0.0
      %1248 = vmatprep.subr.mxu0 0.0
      %1249 = vmatpush1.msra.mxu0 0.0
      %1250 = vmatprep.mubr.f32.mxu0 0.0
      %1251 = vmatmul.mubr.f32.gmra.mrb[0].mxu0 %v1184
      %v1252 = vpop.f32.mrb[0].mxu0
      %v1253 = vadd.f32 %v1179, %v1252
      %v1254 = vpop.f32.mrb[0].mxu0
      %v1255 = vadd.f32 %v1181, %v1254
      %1256 = vdwg.mxu0
      %v1257 = vmul.f32 %v1253, %v1105
      %v1258 = vmul.f32 %v1255, %v1106
      %v1261 = vcombine.low %v1257, %v1258
      %1263 = vst [vmem:[%s356] sm:$0xff] %v1261
      %s1264 = smul.u32 2, %s20
      %p1265 = scmp.lt.s32.totalorder %s1264, 3
      %s1266 = scalar_select %p1265, %s1264, 3
      %s1267 = smul.addr %s1266, 4
      %s1268 = scalar_lea.vmem %s9, %s1267
      // Predicated region
      $region57: #{greybox_forward.1} parent=55 // pred_check
        %p1269 = pneg %p237
      $region58: #{greybox_forward.1} parent=55 // pred_check_branch
        %1271 = sbr.rel (%p1269) target = $region60
      $region59: #{greybox_forward.1} parent=55 // pred_region
        %s1272 = smul.u32 2, %s20
      $region60: #{greybox_forward.1} parent=55 // pred_fallthru
        _
    $region56: #{greybox_forward.1} parent=5 // pred_fallthru
      _
    %p1273 = scmp.le.s32.totalorder 2, %s15
    // Predicated region
    $region61: #{greybox_forward.1} parent=5 // pred_check
      %p1274 = pneg %p1273
    $region62: #{greybox_forward.1} parent=5 // pred_check_branch
      %1276 = sbr.rel (%p1274) target = $region64
    $region63: #{greybox_forward.1} parent=5 // pred_region
      %s1277 = ssub.s32 %s15, 2
      // Predicated region
      $region65: #{greybox_forward.1} parent=63 // pred_check
        %p1278 = pneg %p243
      $region66: #{greybox_forward.1} parent=63 // pred_check_branch
        %1280 = sbr.rel (%p1278) target = $region68
      $region67: #{greybox_forward.1} parent=63 // pred_region
        %s1281 = smul.u32 2, %s21
        %p1282 = scmp.lt.s32.totalorder %s1281, 3
        %s1283 = scalar_select %p1282, %s1281, 3
        %s1284 = smul.addr %s1283, 4
        %s1285 = scalar_lea.vmem %s9, %s1284
      $region68: #{greybox_forward.1} parent=63 // pred_fallthru
        _
    $region64: #{greybox_forward.1} parent=5 // pred_fallthru
      _
  $region6: #{greybox_forward.1} parent=0 // loop_footer
    %s19 = sadd.s32 1, %s15
  $region7: #{greybox_forward.1} parent=0 // loop_footer_branch
    %14 = sbr.rel target = $region3
  $region8: #{greybox_forward.1} parent=0 // loop_exit
    _

</llo_original>
